<compile_context>
chip_gen: v7x
topology: tpu7x:2x2x1
jax: 0.10.0
libtpu: 0.0.40
codegen_flags: <defaults>
</compile_context>

<pallas_src>
import functools
import math

import jax
import jax.numpy as jnp
from jax.experimental import pallas as pl
from jax.experimental.pallas import tpu as pltpu


# ----------------------------------------------------------------------------
# Helpers
# ----------------------------------------------------------------------------
def _round_up(x, m):
    return ((x + m - 1) // m) * m


def _pad_axis(x, axis, target, value=0.0):
    pad = target - x.shape[axis]
    if pad <= 0:
        return x
    widths = [(0, 0)] * x.ndim
    widths[axis] = (0, pad)
    return jnp.pad(x, widths, constant_values=value)


def _tpu_vmem_capacity_bytes():
    try:
        info = pltpu.get_tpu_info()
        cap = getattr(info, "vmem_capacity_bytes", None)
        if cap:
            return int(cap)
    except Exception:
        pass
    return 64 * 1024 * 1024  # conservative default (v7x per-TC VMEM)


def _generation_caps():
    cap = _tpu_vmem_capacity_bytes()
    if cap >= 96 * 1024 * 1024:
        # v5e / v6e: 128 MiB VMEM -> large tiles, high scoped limit.
        return dict(bB_cap=16, tN_cap=8192,
                    vmem_budget=48 * 1024 * 1024,
                    vmem_limit=96 * 1024 * 1024)
    # v7x: 64 MiB VMEM per TensorCore -> keep tiles / scoped limit small.
    return dict(bB_cap=8, tN_cap=4096,
                vmem_budget=22 * 1024 * 1024,
                vmem_limit=44 * 1024 * 1024)


def _choose_batch_tile(B, cap):
    """Pick bB <= cap minimizing (#batch steps, padded B), prefer bigger tiles."""
    cap = max(1, min(B, cap))
    best_key, best_t = None, 1
    for t in range(1, cap + 1):
        steps = -(-B // t)
        key = (steps, steps * t, -t)
        if best_key is None or key < best_key:
            best_key, best_t = key, t
    return best_t, -(-B // best_t) * best_t  # (bB, Bp)


def _choose_lane_tile(Np, per_lane_bytes, budget, cap):
    """Largest 128-multiple tN under the VMEM budget; prefer exact divisors of Np."""
    tN = max(128, (min(Np, cap) // 128) * 128)
    while tN > 128 and tN * per_lane_bytes > budget:
        tN -= 128
    if Np % tN:
        div = 128
        for cand in range(tN, 127, -128):
            if Np % cand == 0:
                div = cand
                break
        if 2 * div >= tN:
            tN = div                 # exact tiling at a comparable size
        # else: keep tN and let Pallas mask the ragged last lane tile (cdiv grid)
    return tN


# ----------------------------------------------------------------------------
# Pallas kernels (lane axis = flattened D*Q*K, sublane axis = M)
# ----------------------------------------------------------------------------
def _induc_value_var_kernel(ell_ref, z_ref, qmv_ref, coef_ref, out_ref, *, degree):
    # ell_ref : [1, tN]              (forward `induc_loc` arg)
    # z_ref   : [M, tN]              (forward `lengthscale` arg, transposed)
    # qmv_ref : [bB, 2, tN]          (q_mean, q_var packed)
    # coef_ref: [degree + 1, M, tN]  (transposed)
    # out_ref : [bB, M, tN]
    f32 = jnp.float32
    ell = ell_ref[...].astype(f32)[None]            # [1, 1, tN]
    z = z_ref[...].astype(f32)[None]                # [1, M, tN]
    qmv = qmv_ref[...].astype(f32)                  # [bB, 2, tN]
    qm = qmv[:, 0:1, :]                             # [bB, 1, tN]
    qv = qmv[:, 1:2, :]                             # [bB, 1, tN]

    # Narrow reciprocal on the EUP slot + one Newton step (~f32 accurate).
    den = qv + ell
    inv = pl.reciprocal(den, approx=True)
    inv = inv * (2.0 - den * inv)

    g_var = qv * ell * inv                          # [bB, 1, tN]  (narrow)
    g_mean = (qm * ell + qv * z) * inv              # [bB, M, tN]  (wide)

    c = lambda k: coef_ref[k].astype(f32)[None]     # [1, M, tN]

    # Clenshaw evaluation of  sum_p c_p * E_p  against the Gaussian raw-moment
    # recurrence E_p = m*E_{p-1} + (p-1)*v*E_{p-2}, E_0 = 1, E_1 = m:
    #   b_k = c_k + m*b_{k+1} + (k+1)*v*b_{k+2}   (b_{D+1} = b_{D+2} = 0)
    #   S   = c_0 + m*b_1 + v*b_2
    if degree == 1:
        acc = c(0) + g_mean * c(1)
    else:
        b_kp1 = c(degree)                           # b_D
        b_k = c(degree - 1) + g_mean * b_kp1        # b_{D-1}
        for k in range(degree - 2, 0, -1):
            b_k, b_kp1 = (c(k) + g_mean * b_k
                          + (float(k + 1) * g_var) * b_kp1), b_k
        acc = c(0) + g_mean * b_k + g_var * b_kp1

    out_ref[...] = acc.astype(out_ref.dtype)


def _induc_value_novar_kernel(qm_ref, coef_ref, out_ref, *, degree):
    # q_var is None -> g_mean = q_mean, g_var = 0 -> E_p = q_mean ** p -> Horner.
    f32 = jnp.float32
    qm = qm_ref[...].astype(f32)                    # [bB, 1, tN]
    acc = coef_ref[degree].astype(f32)[None]        # [1, M, tN]
    for k in range(degree - 1, -1, -1):
        acc = coef_ref[k].astype(f32)[None] + qm * acc
    if acc.shape != out_ref.shape:
        acc = jnp.broadcast_to(acc, out_ref.shape)
    out_ref[...] = acc.astype(out_ref.dtype)


# ----------------------------------------------------------------------------
# One-time parameter relayout (call at parameter-init / load time).
# ----------------------------------------------------------------------------
def prepare_induc_value_params(lengthscale, induc_loc, induc_value_coef, degree,
                               *, param_dtype=None):
    size = tuple(induc_value_coef.shape[1:-1])      # (D, Q, K)
    M = induc_value_coef.shape[-1]
    N = int(math.prod(size))
    Np = _round_up(N, 128)                          # pad only to the lane tile
    assert induc_value_coef.shape[0] == degree + 1
    assert tuple(lengthscale.shape) == size + (M,)
    assert tuple(induc_loc.shape) == size

    pdt = param_dtype or induc_value_coef.dtype
    coef_t = _pad_axis(
        jnp.swapaxes(induc_value_coef.reshape(degree + 1, N, M), 1, 2), -1, Np
    ).astype(pdt)
    z_t = _pad_axis(jnp.swapaxes(lengthscale.reshape(N, M), 0, 1), -1, Np).astype(pdt)
    # ell stays f32 (tiny) and is padded with 1.0 so (q_var + ell) != 0 in pad lanes.
    ell = _pad_axis(induc_loc.reshape(1, N).astype(jnp.float32), -1, Np, value=1.0)
    return dict(coef_t=coef_t, z_t=z_t, ell=ell,
                size=size, M=M, N=N, Np=Np, degree=degree)


# ----------------------------------------------------------------------------
# Forward pass on prepared parameters.
# ----------------------------------------------------------------------------
def induc_value_func_prepared(params, q_mean, q_var=None, *, lane_dense_out=False):
    degree = params["degree"]
    size, M, N, Np = params["size"], params["M"], params["N"], params["Np"]
    coef_t, z_t, ell = params["coef_t"], params["z_t"], params["ell"]

    if degree == 0:
        # Module semantics: E[u] == induc_value_coef[0] (no batch dimension).
        return jnp.swapaxes(coef_t[0, :, :N], 0, 1).reshape(*size, M)

    B = q_mean.shape[0]
    assert tuple(q_mean.shape[1:]) == size

    out_dtype = jnp.result_type(q_mean.dtype, coef_t.dtype)
    caps = _generation_caps()
    bB, Bp = _choose_batch_tile(B, caps["bB_cap"])

    act_isz = jnp.dtype(q_mean.dtype).itemsize
    par_isz = jnp.dtype(coef_t.dtype).itemsize
    out_isz = jnp.dtype(out_dtype).itemsize
    per_lane = (2 * par_isz * ((degree + 1) * M + M + 1)   # coef + z + ell (x2 buf)
                + 2 * act_isz * (2 * bB)                   # packed q_mean/q_var
                + 2 * out_isz * (bB * M)                   # output block
                + 4 * 4 * (bB * M))                        # wide f32 in-kernel temps
    tN = _choose_lane_tile(Np, per_lane, caps["vmem_budget"], caps["tN_cap"])

    grid = (pl.cdiv(Np, tN), Bp // bB)   # N outer (megacore-split axis), batch inner

    qm = _pad_axis(q_mean.reshape(B, N).astype(q_mean.dtype), -1, Np)
    qm = _pad_axis(qm, 0, Bp)

    coef_spec = pl.BlockSpec((degree + 1, M, tN), lambda ni, bi: (0, 0, ni))
    out_spec = pl.BlockSpec((bB, M, tN), lambda ni, bi: (bi, 0, ni))

    if q_var is not None:
        qv = _pad_axis(q_var.reshape(B, N), -1, Np)
        qv = _pad_axis(qv, 0, Bp, value=1.0)             # keep q_var + ell away from 0
        qmv = jnp.stack([qm, qv], axis=1)                # one packed [Bp, 2, Np] stream
        kernel = functools.partial(_induc_value_var_kernel, degree=degree)
        in_specs = [
            pl.BlockSpec((1, tN), lambda ni, bi: (0, ni)),          # ell
            pl.BlockSpec((M, tN), lambda ni, bi: (0, ni)),          # z (transposed)
            pl.BlockSpec((bB, 2, tN), lambda ni, bi: (bi, 0, ni)),  # q_mean | q_var
            coef_spec,
        ]
        args = (ell, z_t, qmv, coef_t)
    else:
        # No variance: z / ell / q_var streams are never materialized or DMA'd.
        kernel = functools.partial(_induc_value_novar_kernel, degree=degree)
        in_specs = [
            pl.BlockSpec((bB, 1, tN), lambda ni, bi: (bi, 0, ni)),
            coef_spec,
        ]
        args = (qm[:, None, :], coef_t)

    out_t = pl.pallas_call(
        kernel,
        out_shape=jax.ShapeDtypeStruct((Bp, M, Np), out_dtype),
        grid=grid,
        in_specs=in_specs,
        out_specs=out_spec,
        compiler_params=pltpu.CompilerParams(
            # N-axis "parallel": a v7x megacore split keeps coef blocks disjoint per
            # core; batch is the serial inner loop reusing the resident coef block.
            dimension_semantics=("parallel", "arbitrary"),
            vmem_limit_bytes=caps["vmem_limit"],
        ),
    )(*args)

    out_t = out_t[:B, :, :N]                 # [B, M, N], lane-dense
    if lane_dense_out:
        return out_t
    # TODO(synk): keep downstream consumers in the lane-dense [B, M, N] layout (or
    # fuse this transpose into the next op) to avoid this extra HBM pass.
    return jnp.swapaxes(out_t, 1, 2).reshape(B, *size, M)


# Convenience wrapper matching the original forward() signature (re-prepares
# the parameter layout on every call; prefer the prepared API in real use).
def induc_value_func(lengthscale, induc_loc, q_mean, q_var, induc_value_coef, degree):
    params = prepare_induc_value_params(lengthscale, induc_loc, induc_value_coef, degree)
    return induc_value_func_prepared(params, q_mean, q_var)


# ----------------------------------------------------------------------------
# Pure-JAX reference (mirrors the PyTorch forward exactly, incl. arg swap).
# ----------------------------------------------------------------------------
def induc_value_func_ref(lengthscale, induc_loc, q_mean, q_var, induc_value_coef, degree):
    moment_coef = [
        [math.comb(n, k) * math.prod(range(1, k, 2))
         for k in range(n + 1) if not k % 2]
        for n in range(1, degree + 1)
    ]
    qm = q_mean[..., None]
    if q_var is not None:
        qv = q_var[..., None]
        ell = induc_loc[..., None]
        cross = qm * ell + qv * lengthscale
        vsum = qv + ell
        g_mean = cross / vsum
        g_var = qv * ell / vsum
    else:
        g_mean = qm
        g_var = jnp.zeros(())
    E_u = induc_value_coef[0]
    for p in range(1, degree + 1):
        E = jnp.zeros(())
        for k in range(p + 1):
            if not k % 2:
                E = (g_mean ** (p - k)) * (g_var ** (k // 2)) \
                    * moment_coef[p - 1][k // 2] + E
        E_u = E * induc_value_coef[p] + E_u
    return E_u


if __name__ == "__main__":
    # Small shapes consistent with the module's docstring.
    B, D, Q, K, M = 2, 3, 4, 8, 16
    degree = 3

    key = jax.random.PRNGKey(0)
    k1, k2, k3, k4, k5 = jax.random.split(key, 5)

    # Deterministic synthetic "parameters" / inputs (the PyTorch __init__ zero-
    # initializes induc_value_coef; random values make the test non-trivial).
    induc_value_coef = jax.random.normal(k1, (degree + 1, D, Q, K, M), jnp.float32)
    lengthscale = jax.random.normal(k2, (D, Q, K, M), jnp.float32)            # z-role
    induc_loc = jnp.abs(jax.random.normal(k3, (D, Q, K), jnp.float32)) + 0.5  # ell-role (>0)
    q_mean = jax.random.normal(k4, (B, D, Q, K), jnp.float32)
    q_var = jnp.abs(jax.random.normal(k5, (B, D, Q, K), jnp.float32)) + 0.1   # >0

    # One-time (parameter-init style) relayout, reused across calls.
    params = prepare_induc_value_params(lengthscale, induc_loc, induc_value_coef, degree)

    ref = induc_value_func_ref(lengthscale, induc_loc, q_mean, q_var,
                               induc_value_coef, degree)

    out = jax.block_until_ready(induc_value_func_prepared(params, q_mean, q_var))
    assert out.shape == (B, D, Q, K, M)
    assert jnp.allclose(out, ref, rtol=1e-4, atol=1e-4), "mismatch vs reference"

    # Lane-dense output layout (preferred downstream layout; skips un-transpose pass).
    out_ld = jax.block_until_ready(
        induc_value_func_prepared(params, q_mean, q_var, lane_dense_out=True))
    ref_ld = jnp.swapaxes(ref.reshape(B, D * Q * K, M), 1, 2)
    assert out_ld.shape == (B, M, D * Q * K)
    assert jnp.allclose(out_ld, ref_ld, rtol=1e-4, atol=1e-4), "mismatch (lane dense)"

    # q_var = None path (no z/ell/q_var streams).
    out_nv = jax.block_until_ready(induc_value_func_prepared(params, q_mean, None))
    ref_nv = induc_value_func_ref(lengthscale, induc_loc, q_mean, None,
                                  induc_value_coef, degree)
    assert jnp.allclose(out_nv, ref_nv, rtol=1e-4, atol=1e-4), "mismatch (no var)"

    # bf16 parameter storage (halves the dominant coef HBM stream), f32 compute.
    coef_bf = induc_value_coef.astype(jnp.bfloat16)
    ls_bf = lengthscale.astype(jnp.bfloat16)
    params_bf = prepare_induc_value_params(ls_bf, induc_loc, coef_bf, degree,
                                           param_dtype=jnp.bfloat16)
    out_bf = jax.block_until_ready(induc_value_func_prepared(params_bf, q_mean, q_var))
    ref_bf = induc_value_func_ref(ls_bf.astype(jnp.float32), induc_loc, q_mean, q_var,
                                  coef_bf.astype(jnp.float32), degree)
    assert jnp.allclose(out_bf, ref_bf, rtol=2e-3, atol=2e-3), "mismatch (bf16 params)"

    # Convenience wrapper with the original forward() signature.
    out_w = jax.block_until_ready(
        induc_value_func(lengthscale, induc_loc, q_mean, q_var, induc_value_coef, degree))
    assert jnp.allclose(out_w, ref, rtol=1e-4, atol=1e-4), "mismatch (wrapper)"

    print("KERNEL_OK")
</pallas_src>

<mosaic_0001>
module attributes {stable_mosaic.version = 11 : i64} {
  func.func @_induc_value_var_kernel(%arg0: i32, %arg1: i32, %arg2: memref<1x128xf32, #tpu.memory_space<vmem>>, %arg3: memref<16x128xf32, #tpu.memory_space<vmem>>, %arg4: memref<2x2x128xf32, #tpu.memory_space<vmem>>, %arg5: memref<4x16x128xf32, #tpu.memory_space<vmem>>, %arg6: memref<2x16x128xf32, #tpu.memory_space<vmem>>) attributes {dimension_semantics = [#tpu.dimension_semantics<parallel>, #tpu.dimension_semantics<arbitrary>], iteration_bounds = array<i64: 1, 1>, scalar_prefetch = 0 : i64, scratch_operands = 0 : i64, tpu.core_type = #tpu.core_type<tc>, window_params = [{transform_indices = @transform_0, window_bounds = array<i64: 1, 128>}, {transform_indices = @transform_1, window_bounds = array<i64: 16, 128>}, {transform_indices = @transform_2, window_bounds = array<i64: 2, 2, 128>}, {transform_indices = @transform_3, window_bounds = array<i64: 4, 16, 128>}, {transform_indices = @transform_4, window_bounds = array<i64: 2, 16, 128>}]} {
    %c0 = arith.constant 0 : index
    %c0_0 = arith.constant 0 : index
    %0 = vector.load %arg2[%c0, %c0_0] : memref<1x128xf32, #tpu.memory_space<vmem>>, vector<1x128xf32>
    %1 = vector.shape_cast %0 : vector<1x128xf32> to vector<1x1x128xf32>
    %c0_1 = arith.constant 0 : index
    %c0_2 = arith.constant 0 : index
    %2 = vector.load %arg3[%c0_1, %c0_2] : memref<16x128xf32, #tpu.memory_space<vmem>>, vector<16x128xf32>
    %3 = vector.shape_cast %2 : vector<16x128xf32> to vector<1x16x128xf32>
    %c0_3 = arith.constant 0 : index
    %c0_4 = arith.constant 0 : index
    %c0_5 = arith.constant 0 : index
    %4 = vector.load %arg4[%c0_3, %c0_4, %c0_5] : memref<2x2x128xf32, #tpu.memory_space<vmem>>, vector<2x2x128xf32>
    %5 = vector.extract_strided_slice %4 {offsets = [0, 0, 0], sizes = [2, 1, 128], strides = [1, 1, 1]} : vector<2x2x128xf32> to vector<2x1x128xf32>
    %6 = vector.extract_strided_slice %4 {offsets = [0, 1, 0], sizes = [2, 1, 128], strides = [1, 1, 1]} : vector<2x2x128xf32> to vector<2x1x128xf32>
    %7 = vector.broadcast %1 : vector<1x1x128xf32> to vector<2x1x128xf32>
    %8 = arith.addf %6, %7 : vector<2x1x128xf32>
    %9 = tpu.reciprocal %8 {approx = true} : vector<2x1x128xf32> -> vector<2x1x128xf32>
    %10 = arith.mulf %8, %9 : vector<2x1x128xf32>
    %cst = arith.constant 2.000000e+00 : f32
    %11 = vector.broadcast %cst : f32 to vector<2x1x128xf32>
    %12 = arith.subf %11, %10 : vector<2x1x128xf32>
    %13 = arith.mulf %9, %12 : vector<2x1x128xf32>
    %14 = vector.broadcast %1 : vector<1x1x128xf32> to vector<2x1x128xf32>
    %15 = arith.mulf %6, %14 : vector<2x1x128xf32>
    %16 = arith.mulf %15, %13 : vector<2x1x128xf32>
    %17 = vector.broadcast %1 : vector<1x1x128xf32> to vector<2x1x128xf32>
    %18 = arith.mulf %5, %17 : vector<2x1x128xf32>
    %19 = vector.broadcast %6 : vector<2x1x128xf32> to vector<2x16x128xf32>
    %20 = vector.broadcast %3 : vector<1x16x128xf32> to vector<2x16x128xf32>
    %21 = arith.mulf %19, %20 : vector<2x16x128xf32>
    %22 = vector.broadcast %18 : vector<2x1x128xf32> to vector<2x16x128xf32>
    %23 = arith.addf %22, %21 : vector<2x16x128xf32>
    %24 = vector.broadcast %13 : vector<2x1x128xf32> to vector<2x16x128xf32>
    %25 = arith.mulf %23, %24 : vector<2x16x128xf32>
    %c3 = arith.constant 3 : index
    %c0_6 = arith.constant 0 : index
    %c0_7 = arith.constant 0 : index
    %26 = vector.load %arg5[%c3, %c0_6, %c0_7] : memref<4x16x128xf32, #tpu.memory_space<vmem>>, vector<1x16x128xf32>
    %27 = vector.shape_cast %26 : vector<1x16x128xf32> to vector<16x128xf32>
    %28 = vector.shape_cast %27 : vector<16x128xf32> to vector<1x16x128xf32>
    %c2 = arith.constant 2 : index
    %c0_8 = arith.constant 0 : index
    %c0_9 = arith.constant 0 : index
    %29 = vector.load %arg5[%c2, %c0_8, %c0_9] : memref<4x16x128xf32, #tpu.memory_space<vmem>>, vector<1x16x128xf32>
    %30 = vector.shape_cast %29 : vector<1x16x128xf32> to vector<16x128xf32>
    %31 = vector.shape_cast %30 : vector<16x128xf32> to vector<1x16x128xf32>
    %32 = vector.broadcast %28 : vector<1x16x128xf32> to vector<2x16x128xf32>
    %33 = arith.mulf %25, %32 : vector<2x16x128xf32>
    %34 = vector.broadcast %31 : vector<1x16x128xf32> to vector<2x16x128xf32>
    %35 = arith.addf %34, %33 : vector<2x16x128xf32>
    %c1 = arith.constant 1 : index
    %c0_10 = arith.constant 0 : index
    %c0_11 = arith.constant 0 : index
    %36 = vector.load %arg5[%c1, %c0_10, %c0_11] : memref<4x16x128xf32, #tpu.memory_space<vmem>>, vector<1x16x128xf32>
    %37 = vector.shape_cast %36 : vector<1x16x128xf32> to vector<16x128xf32>
    %38 = vector.shape_cast %37 : vector<16x128xf32> to vector<1x16x128xf32>
    %39 = arith.mulf %25, %35 : vector<2x16x128xf32>
    %40 = vector.broadcast %38 : vector<1x16x128xf32> to vector<2x16x128xf32>
    %41 = arith.addf %40, %39 : vector<2x16x128xf32>
    %cst_12 = arith.constant 2.000000e+00 : f32
    %42 = vector.broadcast %cst_12 : f32 to vector<2x1x128xf32>
    %43 = arith.mulf %42, %16 : vector<2x1x128xf32>
    %44 = vector.broadcast %43 : vector<2x1x128xf32> to vector<2x16x128xf32>
    %45 = vector.broadcast %28 : vector<1x16x128xf32> to vector<2x16x128xf32>
    %46 = arith.mulf %44, %45 : vector<2x16x128xf32>
    %47 = arith.addf %41, %46 : vector<2x16x128xf32>
    %c0_13 = arith.constant 0 : index
    %c0_14 = arith.constant 0 : index
    %c0_15 = arith.constant 0 : index
    %48 = vector.load %arg5[%c0_13, %c0_14, %c0_15] : memref<4x16x128xf32, #tpu.memory_space<vmem>>, vector<1x16x128xf32>
    %49 = vector.shape_cast %48 : vector<1x16x128xf32> to vector<16x128xf32>
    %50 = vector.shape_cast %49 : vector<16x128xf32> to vector<1x16x128xf32>
    %51 = arith.mulf %25, %47 : vector<2x16x128xf32>
    %52 = vector.broadcast %50 : vector<1x16x128xf32> to vector<2x16x128xf32>
    %53 = arith.addf %52, %51 : vector<2x16x128xf32>
    %54 = vector.broadcast %16 : vector<2x1x128xf32> to vector<2x16x128xf32>
    %55 = arith.mulf %54, %35 : vector<2x16x128xf32>
    %56 = arith.addf %53, %55 : vector<2x16x128xf32>
    %c0_16 = arith.constant 0 : index
    %c0_17 = arith.constant 0 : index
    %c0_18 = arith.constant 0 : index
    %57 = vector.load %arg6[%c0_16, %c0_17, %c0_18] : memref<2x16x128xf32, #tpu.memory_space<vmem>>, vector<2x16x128xf32>
    tpu.vector_store %arg6[%c0_16, %c0_17, %c0_18], %56 {strides = array<i32>} : memref<2x16x128xf32, #tpu.memory_space<vmem>>, vector<2x16x128xf32>,
    return
  }
  func.func @transform_0(%arg0: i32, %arg1: i32) -> (i32, i32) {
    %c0_i32 = arith.constant 0 : i32
    %c0_i32_0 = arith.constant 0 : i32
    return %c0_i32, %arg0 : i32, i32
  }
  func.func @transform_1(%arg0: i32, %arg1: i32) -> (i32, i32) {
    %c0_i32 = arith.constant 0 : i32
    %c0_i32_0 = arith.constant 0 : i32
    return %c0_i32, %arg0 : i32, i32
  }
  func.func @transform_2(%arg0: i32, %arg1: i32) -> (i32, i32, i32) {
    %c0_i32 = arith.constant 0 : i32
    %c0_i32_0 = arith.constant 0 : i32
    return %arg1, %c0_i32, %arg0 : i32, i32, i32
  }
  func.func @transform_3(%arg0: i32, %arg1: i32) -> (i32, i32, i32) {
    %c0_i32 = arith.constant 0 : i32
    %c0_i32_0 = arith.constant 0 : i32
    %c0_i32_1 = arith.constant 0 : i32
    return %c0_i32, %c0_i32_0, %arg0 : i32, i32, i32
  }
  func.func @transform_4(%arg0: i32, %arg1: i32) -> (i32, i32, i32) {
    %c0_i32 = arith.constant 0 : i32
    %c0_i32_0 = arith.constant 0 : i32
    return %arg1, %c0_i32, %arg0 : i32, i32, i32
  }
}

</mosaic_0001>

<llo_original>
// kernel: tpu_custom_call.1
$region0: #{tpu_custom_call.1}
  #allocation0 [shape = 'u32[]', space=smem, size = 0x4, offset = 0x4, fixed_abs, tag = 'smem constant byte address 0x4 - core index']
  #allocation1 [shape = 'u32[144,128]{1,0:T(1,128)}', space=vmem, size = 0x12000, scoped, tag = 'internal scratch']
  %s0 = inlined_call_operand.hbm [shape: f32[1,128], index: 0, kind: input, shape index: {}]
  %s1 = inlined_call_operand.hbm [shape: f32[16,128], index: 1, kind: input, shape index: {}]
  %s2 = inlined_call_operand.vmem [shape: f32[2,2,128], index: 2, kind: input, shape index: {}]
  %s3 = inlined_call_operand.hbm [shape: f32[4,16,128], index: 3, kind: input, shape index: {}]
  %s4 = inlined_call_operand.hbm [shape: f32[2,16,128], index: 4, kind: output, shape index: {}]
  %s5 = sld [smem:[#allocation0]]
  $region38: #{tpu_custom_call.1} parent=0
    _
  %s7 = ssub.s32 1, %s5
  %s8 = scalar_select 0, %s7, %s5
  $region1: #{tpu_custom_call.1} parent=0
    #allocation2 [shape = 'u8[512]{0}', space=vmem, size = 0x400, scoped, tag = 'input window, operand 0, single buffered']
    #allocation3 [shape = 's32[1]{0}', space=sflag, size = 0x4, scoped, tag = 'scoped memory for tpu_custom_call.1']
    #allocation4 [shape = 's32[1]{0}', space=sflag, size = 0x4, scoped, tag = 'scoped memory for tpu_custom_call.1']
    #allocation5 [shape = 'u8[8192]{0}', space=vmem, size = 0x2000, scoped, tag = 'input window, operand 1, single buffered']
    #allocation6 [shape = 's32[1]{0}', space=sflag, size = 0x4, scoped, tag = 'scoped memory for tpu_custom_call.1']
    #allocation7 [shape = 'u8[32768]{0}', space=vmem, size = 0x8000, scoped, tag = 'input window, operand 3, single buffered']
    #allocation8 [shape = 'u8[16384]{0}', space=vmem, size = 0x4000, scoped, tag = 'output window, operand 0, single buffered']
    %9 = vsyncpa [#allocation3], 0
    %10 = vsyncpa [#allocation6], 0
    %11 = vsyncpa [#allocation4], 0
    // Predicated region
    $region2: #{tpu_custom_call.1} parent=1 // pred_check
      _
    $region3: #{tpu_custom_call.1} parent=1 // pred_check_branch
      %13 = sbr.rel (0) target = $region5
    $region4: #{tpu_custom_call.1} parent=1 // pred_region
      %s15 = ssub.s32 16, 16
      %16 = vsyncadd [#allocation3], %s15
      %s18 = sshll.u32 [#allocation2], 4
      %s19 = int_to_ptr.vmem [resolvable:$true] %s18
      %21 = dma.hbm_to_vmem [thread:$0]  %s0, 16, %s19, [#allocation3]
    $region5: #{tpu_custom_call.1} parent=1 // pred_fallthru
      _
    // Predicated region
    $region6: #{tpu_custom_call.1} parent=1 // pred_check
      _
    $region7: #{tpu_custom_call.1} parent=1 // pred_check_branch
      %23 = sbr.rel (0) target = $region9
    $region8: #{tpu_custom_call.1} parent=1 // pred_region
      %s25 = ssub.s32 256, 256
      %26 = vsyncadd [#allocation6], %s25
      %s27 = sshll.u32 [#allocation5], 4
      %s28 = int_to_ptr.vmem [resolvable:$true] %s27
      %33 = dma.hbm_to_vmem [thread:$0]  %s1, 256, %s28, [#allocation6], 128, 128, 8
    $region9: #{tpu_custom_call.1} parent=1 // pred_fallthru
      _
    // Predicated region
    $region10: #{tpu_custom_call.1} parent=1 // pred_check
      _
    $region11: #{tpu_custom_call.1} parent=1 // pred_check_branch
      %35 = sbr.rel (0) target = $region13
    $region12: #{tpu_custom_call.1} parent=1 // pred_region
      _
    $region13: #{tpu_custom_call.1} parent=1 // pred_fallthru
      _
    // Predicated region
    $region14: #{tpu_custom_call.1} parent=1 // pred_check
      _
    $region15: #{tpu_custom_call.1} parent=1 // pred_check_branch
      %37 = sbr.rel (0) target = $region17
    $region16: #{tpu_custom_call.1} parent=1 // pred_region
      %s39 = ssub.s32 1024, 1024
      %40 = vsyncadd [#allocation6], %s39
      %s41 = sshll.u32 [#allocation7], 4
      %s42 = int_to_ptr.vmem [resolvable:$true] %s41
      %47 = dma.hbm_to_vmem [thread:$0]  %s3, 1024, %s42, [#allocation6], 128, 128, 8
    $region17: #{tpu_custom_call.1} parent=1 // pred_fallthru
      _
    // Predicated region
    $region18: #{tpu_custom_call.1} parent=1 // pred_check
      _
    $region19: #{tpu_custom_call.1} parent=1 // pred_check_branch
      %49 = sbr.rel (0) target = $region21
    $region20: #{tpu_custom_call.1} parent=1 // pred_region
      %50 = dma.done [#allocation3], 16
    $region21: #{tpu_custom_call.1} parent=1 // pred_fallthru
      _
    // Predicated region
    $region22: #{tpu_custom_call.1} parent=1 // pred_check
      _
    $region23: #{tpu_custom_call.1} parent=1 // pred_check_branch
      %52 = sbr.rel (0) target = $region25
    $region24: #{tpu_custom_call.1} parent=1 // pred_region
      %53 = dma.done [#allocation6], 256
    $region25: #{tpu_custom_call.1} parent=1 // pred_fallthru
      _
    // Predicated region
    $region26: #{tpu_custom_call.1} parent=1 // pred_check
      _
    $region27: #{tpu_custom_call.1} parent=1 // pred_check_branch
      %55 = sbr.rel (0) target = $region29
    $region28: #{tpu_custom_call.1} parent=1 // pred_region
      %56 = dma.done [#allocation6], 1024
    $region29: #{tpu_custom_call.1} parent=1 // pred_fallthru
      _
    %v57 = vld [vmem:[#allocation2] sm:$0x1]
    %v58 = vld [vmem:[#allocation5] sm:$0xff]
    %v59 = vld [vmem:[#allocation5 + $0x8] sm:$0xff]
    %v60 = vld [vmem:[%s2] sm:$0x3]
    %v61 = vld [vmem:[%s2 + $0x2] sm:$0x3]
    %v63 = vlaneseq
    %v64 = vshrl.u32 %v63, 7
    %v65 = vsub.s32 0, %v64
    %v66 = vrot.slane %v57, %v65
    %v68 = vadd.f32 %v60, %v66
    %v69 = vadd.f32 %v61, %v66
    %v70 = vrcp.pop %v68
    %v71 = vrcp.pop %v69
    %v72 = vmul.f32 %v68, %v70
    %v73 = vmul.f32 %v69, %v71
    %v74 = vsub.f32 2.0, %v72
    %v75 = vsub.f32 2.0, %v73
    %v76 = vmul.f32 %v70, %v74
    %v77 = vmul.f32 %v71, %v75
    %v78 = vmul.f32 %v60, %v66
    %v79 = vmul.f32 %v61, %v66
    %v80 = vmul.f32 %v78, %v76
    %v81 = vmul.f32 %v79, %v77
    %v82 = vmul.f32 %v60, %v57
    %v83 = vmul.f32 %v61, %v57
    %v84 = vlaneseq
    %v85 = vshrl.u32 %v84, 7
    %v86 = vsub.s32 1, %v85
    %v87 = vrot.slane %v60, %v86
    %v88 = vlaneseq
    %v89 = vshrl.u32 %v88, 7
    %v90 = vsub.s32 1, %v89
    %v91 = vrot.slane %v61, %v90
    %v92 = vmul.f32 %v87, %v58
    %v93 = vmul.f32 %v87, %v59
    %v94 = vmul.f32 %v91, %v58
    %v95 = vmul.f32 %v91, %v59
    %v96 = vlaneseq
    %v97 = vshrl.u32 %v96, 7
    %v98 = vsub.s32 0, %v97
    %v99 = vrot.slane %v82, %v98
    %v100 = vlaneseq
    %v101 = vshrl.u32 %v100, 7
    %v102 = vsub.s32 0, %v101
    %v103 = vrot.slane %v83, %v102
    %v104 = vadd.f32 %v99, %v92
    %v105 = vadd.f32 %v99, %v93
    %v106 = vadd.f32 %v103, %v94
    %v107 = vadd.f32 %v103, %v95
    %v108 = vlaneseq
    %v109 = vshrl.u32 %v108, 7
    %v110 = vsub.s32 1, %v109
    %v111 = vrot.slane %v76, %v110
    %v112 = vlaneseq
    %v113 = vshrl.u32 %v112, 7
    %v114 = vsub.s32 1, %v113
    %v115 = vrot.slane %v77, %v114
    %v116 = vmul.f32 %v104, %v111
    %v117 = vmul.f32 %v105, %v111
    %v118 = vmul.f32 %v106, %v115
    %v119 = vmul.f32 %v107, %v115
    %s120 = scalar_lea.vmem [#allocation7], 48
    %v121 = vld [vmem:[%s120] sm:$0xff]
    %v122 = vld [vmem:[%s120 + $0x8] sm:$0xff]
    %s123 = scalar_lea.vmem [#allocation7], 32
    %v124 = vld [vmem:[%s123] sm:$0xff]
    %v125 = vld [vmem:[%s123 + $0x8] sm:$0xff]
    %v126 = vmul.f32 %v116, %v121
    %v127 = vmul.f32 %v117, %v122
    %v128 = vmul.f32 %v118, %v121
    %v129 = vmul.f32 %v119, %v122
    %v130 = vadd.f32 %v124, %v126
    %v131 = vadd.f32 %v125, %v127
    %v132 = vadd.f32 %v124, %v128
    %v133 = vadd.f32 %v125, %v129
    %s134 = scalar_lea.vmem [#allocation7], 16
    %v135 = vld [vmem:[%s134] sm:$0xff]
    %v136 = vld [vmem:[%s134 + $0x8] sm:$0xff]
    %v137 = vmul.f32 %v116, %v130
    %v138 = vmul.f32 %v117, %v131
    %v139 = vmul.f32 %v118, %v132
    %v140 = vmul.f32 %v119, %v133
    %v141 = vadd.f32 %v135, %v137
    %v142 = vadd.f32 %v136, %v138
    %v143 = vadd.f32 %v135, %v139
    %v144 = vadd.f32 %v136, %v140
    %v145 = vmul.f32 %v80, 2.0
    %v146 = vmul.f32 %v81, 2.0
    %v147 = vlaneseq
    %v148 = vshrl.u32 %v147, 7
    %v149 = vsub.s32 1, %v148
    %v150 = vrot.slane %v145, %v149
    %v151 = vlaneseq
    %v152 = vshrl.u32 %v151, 7
    %v153 = vsub.s32 1, %v152
    %v154 = vrot.slane %v146, %v153
    %v155 = vmul.f32 %v150, %v121
    %v156 = vmul.f32 %v150, %v122
    %v157 = vmul.f32 %v154, %v121
    %v158 = vmul.f32 %v154, %v122
    %v159 = vadd.f32 %v141, %v155
    %v160 = vadd.f32 %v142, %v156
    %v161 = vadd.f32 %v143, %v157
    %v162 = vadd.f32 %v144, %v158
    %v163 = vld [vmem:[#allocation7] sm:$0xff]
    %v164 = vld [vmem:[#allocation7 + $0x8] sm:$0xff]
    %v165 = vmul.f32 %v116, %v159
    %v166 = vmul.f32 %v117, %v160
    %v167 = vmul.f32 %v118, %v161
    %v168 = vmul.f32 %v119, %v162
    %v169 = vadd.f32 %v163, %v165
    %v170 = vadd.f32 %v164, %v166
    %v171 = vadd.f32 %v163, %v167
    %v172 = vadd.f32 %v164, %v168
    %v173 = vlaneseq
    %v174 = vshrl.u32 %v173, 7
    %v175 = vsub.s32 1, %v174
    %v176 = vrot.slane %v80, %v175
    %v177 = vlaneseq
    %v178 = vshrl.u32 %v177, 7
    %v179 = vsub.s32 1, %v178
    %v180 = vrot.slane %v81, %v179
    %v181 = vmul.f32 %v176, %v130
    %v182 = vmul.f32 %v176, %v131
    %v183 = vmul.f32 %v180, %v132
    %v184 = vmul.f32 %v180, %v133
    %v185 = vadd.f32 %v169, %v181
    %v186 = vadd.f32 %v170, %v182
    %v187 = vadd.f32 %v171, %v183
    %v188 = vadd.f32 %v172, %v184
    %189 = vst [vmem:[#allocation8] sm:$0xff] %v185
    %190 = vst [vmem:[#allocation8 + $0x8] sm:$0xff] %v186
    %191 = vst [vmem:[#allocation8 + $0x10] sm:$0xff] %v187
    %192 = vst [vmem:[#allocation8 + $0x18] sm:$0xff] %v188
    // Predicated region
    $region30: #{tpu_custom_call.1} parent=1 // pred_check
      _
    $region31: #{tpu_custom_call.1} parent=1 // pred_check_branch
      %194 = sbr.rel (0) target = $region33
    $region32: #{tpu_custom_call.1} parent=1 // pred_region
      %s196 = ssub.s32 512, 512
      %197 = vsyncadd [#allocation4], %s196
      %s198 = sshll.u32 [#allocation8], 4
      %s199 = int_to_ptr.vmem [resolvable:$true] %s198
      %204 = dma.vmem_to_hbm [thread:$0]  %s199, 512, %s4, [#allocation4], 128, 128, 8
    $region33: #{tpu_custom_call.1} parent=1 // pred_fallthru
      _
    // Predicated region
    $region34: #{tpu_custom_call.1} parent=1 // pred_check
      _
    $region35: #{tpu_custom_call.1} parent=1 // pred_check_branch
      %206 = sbr.rel (0) target = $region37
    $region36: #{tpu_custom_call.1} parent=1 // pred_region
      %207 = dma.done [#allocation4], 512
    $region37: #{tpu_custom_call.1} parent=1 // pred_fallthru
      _
    %208 = vsyncpa [#allocation3], 1
    %209 = vsyncpa [#allocation6], 1
    %210 = vsyncpa [#allocation4], 1

</llo_original>
